<compile_context>
chip_gen: v5e
topology: v5e:2x2
jax: 0.10.0
libtpu: 0.0.40
codegen_flags: <defaults>
</compile_context>

<pallas_src>
import jax
import jax.numpy as jnp
from jax.experimental import pallas as pl
from jax.experimental.pallas import tpu as pltpu


_VMEM_BUDGET = 32 * 1024 * 1024   # target working set (fits every generation)
_VMEM_LIMIT = 48 * 1024 * 1024    # scoped-VMEM limit handed to Mosaic (< v7x 64 MiB)
_MAX_TB = 512                     # measured mem-bound kernels ~85% roofline at 512


def _make_fused_kernel(num_modalities: int, hidden_pad: int):
    """Kernel refs = (x0, w0, b0, x1, w1, b1, ..., out)."""

    def kernel(*refs):
        out_ref = refs[-1]
        for i in range(num_modalities):          # static unroll over modalities
            x = refs[3 * i][...]                 # (TB, F_i)
            w = refs[3 * i + 1][...]             # (F_i, Hp)
            b = refs[3 * i + 2][...]             # (1, Hp), already float32
            y = jnp.dot(x, w, preferred_element_type=jnp.float32)   # MXU, f32 acc
            y = jnp.maximum(y + b, 0.0)                             # bias + ReLU (VPU)
            # Static, 128-aligned column slab of the output -> lane-dense,
            # unmasked stores.  The torch.cat is free.
            out_ref[:, i * hidden_pad:(i + 1) * hidden_pad] = y.astype(out_ref.dtype)

    return kernel


def _pick_batch_tile(B, feat_dims, out_cols, in_bytes, out_bytes, w_bytes, h_pad, sublane):
    """Largest batch tile that fits the VMEM budget; prefer >= 2 grid steps."""
    weight_bytes = sum((F * h_pad + h_pad) * w_bytes for F in feat_dims)
    # Budget assumes the worst case of double-buffered weights (the Buffered(1)
    # request below may not be honored on every jax version).
    avail = _VMEM_BUDGET - 2 * weight_bytes
    per_row = 2 * sum(feat_dims) * in_bytes + 2 * out_cols * out_bytes   # dbl-buffered x + out
    tb = min(_MAX_TB, B, max(sublane, avail // max(per_row, 1)))
    if B > sublane:                       # >= 2 grid steps -> both v7x TensorCores busy
        tb = min(tb, -(-B // 2))
    if tb < B:                            # partial-B tiles must be sublane multiples
        tb = max(sublane, (tb // sublane) * sublane)
    return int(tb)


def custom_concat(modalities, weights, biases, *, compute_dtype=None):
    """Pallas implementation of CustomConcat.forward.

    modalities: list of (B, F_i) arrays (common dtype).
    weights:    list of (F_i, H) arrays.
    biases:     list of (H,) arrays.
    compute_dtype: optional dtype (e.g. jnp.bfloat16) for the x/W data path.
    Returns:    (B, num_modalities * H) array in the modalities' dtype.
    """
    modalities = [jnp.asarray(m) for m in modalities]
    weights = [jnp.asarray(w) for w in weights]
    biases = [jnp.asarray(b) for b in biases]
    n = len(modalities)
    assert n == len(weights) == len(biases) and n >= 1

    B = modalities[0].shape[0]
    in_dtype = modalities[0].dtype
    assert all(m.dtype == in_dtype for m in modalities), "torch.cat requires one dtype"
    assert all(m.ndim == 2 and m.shape[0] == B for m in modalities)

    H = weights[0].shape[1]
    assert all(w.shape == (m.shape[1], H) for w, m in zip(weights, modalities))
    assert all(b.shape == (H,) for b in biases)

    out_dtype = in_dtype
    cdt = jnp.dtype(compute_dtype) if compute_dtype is not None else jnp.dtype(in_dtype)

    # Guard the lane-dense-output assumption: pad the per-modality width to a
    # multiple of 128.  (No-op when H is already 128-aligned.)
    H_pad = ((H + 127) // 128) * 128

    xs, ws, bs = [], [], []
    for x, w, b in zip(modalities, weights, biases):
        xs.append(x.astype(cdt))
        w = w.astype(cdt)
        b = b.astype(jnp.float32).reshape(1, H)   # pre-cast bias: no cast in-kernel
        if H_pad != H:
            w = jnp.pad(w, ((0, 0), (0, H_pad - H)))
            b = jnp.pad(b, ((0, 0), (0, H_pad - H)))
        ws.append(w)
        bs.append(b)

    feat_dims = [x.shape[1] for x in xs]
    sublane = 8 * max(1, 4 // cdt.itemsize)       # 8 rows for f32, 16 for bf16
    TB = _pick_batch_tile(
        B, feat_dims, n * H_pad,
        in_bytes=cdt.itemsize,
        out_bytes=jnp.dtype(out_dtype).itemsize,
        w_bytes=cdt.itemsize,
        h_pad=H_pad, sublane=sublane)
    grid = (pl.cdiv(B, TB),)

    def build_and_run(single_buffer_weights: bool):
        weight_kwargs = {}
        if single_buffer_weights and hasattr(pl, "Buffered"):
            # Constant index_map -> the block never changes; a single VMEM
            # buffer halves resident weight bytes (headroom for a bigger TB).
            weight_kwargs = dict(pipeline_mode=pl.Buffered(1))

        in_specs, args = [], []
        for x, w, b in zip(xs, ws, bs):
            F = x.shape[1]
            in_specs.append(pl.BlockSpec((TB, F), lambda g: (g, 0)))        # per-batch-tile
            in_specs.append(pl.BlockSpec((F, H_pad), lambda g: (0, 0), **weight_kwargs))
            in_specs.append(pl.BlockSpec((1, H_pad), lambda g: (0, 0), **weight_kwargs))
            args.extend([x, w, b])
        out_spec = pl.BlockSpec((TB, n * H_pad), lambda g: (g, 0))

        call = pl.pallas_call(
            _make_fused_kernel(n, H_pad),
            out_shape=jax.ShapeDtypeStruct((B, n * H_pad), out_dtype),
            grid=grid,
            in_specs=in_specs,
            out_specs=out_spec,
            compiler_params=pltpu.CompilerParams(
                dimension_semantics=("parallel",),     # batch tiles split across TCs
                vmem_limit_bytes=_VMEM_LIMIT,          # let the larger tile compile
            ),
        )
        return call(*args)

    try:
        out = build_and_run(single_buffer_weights=True)
    except Exception:
        # Some jax versions reject Buffered(1) on pallas_call BlockSpecs; fall
        # back to default double-buffering (identical results, more VMEM).
        out = build_and_run(single_buffer_weights=False)

    if H_pad != H:
        out = jnp.concatenate([out[:, i * H_pad:i * H_pad + H] for i in range(n)], axis=1)
    return out


if __name__ == "__main__":
    key = jax.random.PRNGKey(0)

    B = 2
    H = 128                      # hidden_dim: multiple of 128 -> lane-dense stores
    feat_dims = [128, 64, 24]    # heterogeneous per-modality feature dims

    keys = jax.random.split(key, 3 * len(feat_dims))
    modalities, weights, biases = [], [], []
    for i, F in enumerate(feat_dims):
        kx, kw, kb = keys[3 * i], keys[3 * i + 1], keys[3 * i + 2]
        modalities.append(jax.random.normal(kx, (B, F), dtype=jnp.float32))
        # nn.Linear default init: U(-1/sqrt(F), 1/sqrt(F))
        bound = 1.0 / (F ** 0.5)
        weights.append(jax.random.uniform(kw, (F, H), jnp.float32, -bound, bound))
        biases.append(jax.random.uniform(kb, (H,), jnp.float32, -bound, bound))

    # Pure-JAX reference mirroring the PyTorch forward.
    ref = jnp.concatenate(
        [jnp.maximum(x @ w + b, 0.0) for x, w, b in zip(modalities, weights, biases)],
        axis=1,
    )
    scale = jnp.max(jnp.abs(ref)) + 1e-6

    # Default (f32) path — matches the PyTorch module's numerics.
    out = jax.block_until_ready(custom_concat(modalities, weights, biases))
    assert out.shape == (B, len(feat_dims) * H), out.shape
    err = jnp.max(jnp.abs(out - ref))
    assert err <= 2e-2 * scale + 1e-3, f"f32 path mismatch vs reference: {err}"

    # Optional bf16 data path (v6e/v7x bandwidth win); loose tolerance.
    out_bf16 = jax.block_until_ready(
        custom_concat(modalities, weights, biases, compute_dtype=jnp.bfloat16))
    err16 = jnp.max(jnp.abs(out_bf16 - ref))
    assert err16 <= 5e-2 * scale + 5e-2, f"bf16 path mismatch vs reference: {err16}"

    print("KERNEL_OK")
</pallas_src>

<mosaic_0001>
module attributes {stable_mosaic.version = 11 : i64} {
  func.func @kernel(%arg0: i32, %arg1: memref<2x128xf32, #tpu.memory_space<vmem>>, %arg2: memref<128x128xf32, #tpu.memory_space<vmem>>, %arg3: memref<1x128xf32, #tpu.memory_space<vmem>>, %arg4: memref<2x64xf32, #tpu.memory_space<vmem>>, %arg5: memref<64x128xf32, #tpu.memory_space<vmem>>, %arg6: memref<1x128xf32, #tpu.memory_space<vmem>>, %arg7: memref<2x24xf32, #tpu.memory_space<vmem>>, %arg8: memref<24x128xf32, #tpu.memory_space<vmem>>, %arg9: memref<1x128xf32, #tpu.memory_space<vmem>>, %arg10: memref<2x384xf32, #tpu.memory_space<vmem>>) attributes {dimension_semantics = [#tpu.dimension_semantics<parallel>], iteration_bounds = array<i64: 1>, scalar_prefetch = 0 : i64, scratch_operands = 0 : i64, tpu.core_type = #tpu.core_type<tc>, window_params = [{transform_indices = @transform_0, window_bounds = array<i64: 2, 128>}, {pipeline_mode = #tpu.pipeline_mode<synchronous>, transform_indices = @transform_1, window_bounds = array<i64: 128, 128>}, {pipeline_mode = #tpu.pipeline_mode<synchronous>, transform_indices = @transform_2, window_bounds = array<i64: 1, 128>}, {transform_indices = @transform_3, window_bounds = array<i64: 2, 64>}, {pipeline_mode = #tpu.pipeline_mode<synchronous>, transform_indices = @transform_4, window_bounds = array<i64: 64, 128>}, {pipeline_mode = #tpu.pipeline_mode<synchronous>, transform_indices = @transform_5, window_bounds = array<i64: 1, 128>}, {transform_indices = @transform_6, window_bounds = array<i64: 2, 24>}, {pipeline_mode = #tpu.pipeline_mode<synchronous>, transform_indices = @transform_7, window_bounds = array<i64: 24, 128>}, {pipeline_mode = #tpu.pipeline_mode<synchronous>, transform_indices = @transform_8, window_bounds = array<i64: 1, 128>}, {transform_indices = @transform_9, window_bounds = array<i64: 2, 384>}]} {
    %c0 = arith.constant 0 : index
    %c0_0 = arith.constant 0 : index
    %0 = vector.load %arg1[%c0, %c0_0] : memref<2x128xf32, #tpu.memory_space<vmem>>, vector<2x128xf32>
    %c0_1 = arith.constant 0 : index
    %c0_2 = arith.constant 0 : index
    %1 = vector.load %arg2[%c0_1, %c0_2] : memref<128x128xf32, #tpu.memory_space<vmem>>, vector<128x128xf32>
    %c0_3 = arith.constant 0 : index
    %c0_4 = arith.constant 0 : index
    %2 = vector.load %arg3[%c0_3, %c0_4] : memref<1x128xf32, #tpu.memory_space<vmem>>, vector<1x128xf32>
    %cst = arith.constant dense<0.000000e+00> : vector<2x128xf32>
    %3 = tpu.matmul %0, %1, %cst {dimension_numbers = #tpu.dot_dimension_numbers<[1], [0], [0], [1], [0, 0, 1, 1], [], []>} : vector<2x128xf32>, vector<128x128xf32>, vector<2x128xf32> -> vector<2x128xf32>
    %4 = vector.broadcast %2 : vector<1x128xf32> to vector<2x128xf32>
    %5 = arith.addf %3, %4 : vector<2x128xf32>
    %cst_5 = arith.constant 0.000000e+00 : f32
    %6 = vector.broadcast %cst_5 : f32 to vector<2x128xf32>
    %7 = arith.maximumf %5, %6 : vector<2x128xf32>
    %c0_6 = arith.constant 0 : index
    %c0_7 = arith.constant 0 : index
    %8 = vector.load %arg10[%c0_6, %c0_7] : memref<2x384xf32, #tpu.memory_space<vmem>>, vector<2x128xf32>
    tpu.vector_store %arg10[%c0_6, %c0_7], %7 {strides = array<i32>} : memref<2x384xf32, #tpu.memory_space<vmem>>, vector<2x128xf32>,
    %c0_8 = arith.constant 0 : index
    %c0_9 = arith.constant 0 : index
    %9 = vector.load %arg4[%c0_8, %c0_9] : memref<2x64xf32, #tpu.memory_space<vmem>>, vector<2x64xf32>
    %c0_10 = arith.constant 0 : index
    %c0_11 = arith.constant 0 : index
    %10 = vector.load %arg5[%c0_10, %c0_11] : memref<64x128xf32, #tpu.memory_space<vmem>>, vector<64x128xf32>
    %c0_12 = arith.constant 0 : index
    %c0_13 = arith.constant 0 : index
    %11 = vector.load %arg6[%c0_12, %c0_13] : memref<1x128xf32, #tpu.memory_space<vmem>>, vector<1x128xf32>
    %cst_14 = arith.constant dense<0.000000e+00> : vector<2x128xf32>
    %12 = tpu.matmul %9, %10, %cst_14 {dimension_numbers = #tpu.dot_dimension_numbers<[1], [0], [0], [1], [0, 0, 1, 1], [], []>} : vector<2x64xf32>, vector<64x128xf32>, vector<2x128xf32> -> vector<2x128xf32>
    %13 = vector.broadcast %11 : vector<1x128xf32> to vector<2x128xf32>
    %14 = arith.addf %12, %13 : vector<2x128xf32>
    %cst_15 = arith.constant 0.000000e+00 : f32
    %15 = vector.broadcast %cst_15 : f32 to vector<2x128xf32>
    %16 = arith.maximumf %14, %15 : vector<2x128xf32>
    %c0_16 = arith.constant 0 : index
    %c128 = arith.constant 128 : index
    %17 = vector.load %arg10[%c0_16, %c128] : memref<2x384xf32, #tpu.memory_space<vmem>>, vector<2x128xf32>
    tpu.vector_store %arg10[%c0_16, %c128], %16 {strides = array<i32>} : memref<2x384xf32, #tpu.memory_space<vmem>>, vector<2x128xf32>,
    %c0_17 = arith.constant 0 : index
    %c0_18 = arith.constant 0 : index
    %18 = vector.load %arg7[%c0_17, %c0_18] : memref<2x24xf32, #tpu.memory_space<vmem>>, vector<2x24xf32>
    %c0_19 = arith.constant 0 : index
    %c0_20 = arith.constant 0 : index
    %19 = vector.load %arg8[%c0_19, %c0_20] : memref<24x128xf32, #tpu.memory_space<vmem>>, vector<24x128xf32>
    %c0_21 = arith.constant 0 : index
    %c0_22 = arith.constant 0 : index
    %20 = vector.load %arg9[%c0_21, %c0_22] : memref<1x128xf32, #tpu.memory_space<vmem>>, vector<1x128xf32>
    %cst_23 = arith.constant dense<0.000000e+00> : vector<2x128xf32>
    %21 = tpu.matmul %18, %19, %cst_23 {dimension_numbers = #tpu.dot_dimension_numbers<[1], [0], [0], [1], [0, 0, 1, 1], [], []>} : vector<2x24xf32>, vector<24x128xf32>, vector<2x128xf32> -> vector<2x128xf32>
    %22 = vector.broadcast %20 : vector<1x128xf32> to vector<2x128xf32>
    %23 = arith.addf %21, %22 : vector<2x128xf32>
    %cst_24 = arith.constant 0.000000e+00 : f32
    %24 = vector.broadcast %cst_24 : f32 to vector<2x128xf32>
    %25 = arith.maximumf %23, %24 : vector<2x128xf32>
    %c0_25 = arith.constant 0 : index
    %c256 = arith.constant 256 : index
    %26 = vector.load %arg10[%c0_25, %c256] : memref<2x384xf32, #tpu.memory_space<vmem>>, vector<2x128xf32>
    tpu.vector_store %arg10[%c0_25, %c256], %25 {strides = array<i32>} : memref<2x384xf32, #tpu.memory_space<vmem>>, vector<2x128xf32>,
    return
  }
  func.func @transform_0(%arg0: i32) -> (i32, i32) {
    %c0_i32 = arith.constant 0 : i32
    %c0_i32_0 = arith.constant 0 : i32
    return %arg0, %c0_i32 : i32, i32
  }
  func.func @transform_1(%arg0: i32) -> (i32, i32) {
    %c0_i32 = arith.constant 0 : i32
    %c0_i32_0 = arith.constant 0 : i32
    %c0_i32_1 = arith.constant 0 : i32
    return %c0_i32, %c0_i32_0 : i32, i32
  }
  func.func @transform_2(%arg0: i32) -> (i32, i32) {
    %c0_i32 = arith.constant 0 : i32
    %c0_i32_0 = arith.constant 0 : i32
    %c0_i32_1 = arith.constant 0 : i32
    return %c0_i32, %c0_i32_0 : i32, i32
  }
  func.func @transform_3(%arg0: i32) -> (i32, i32) {
    %c0_i32 = arith.constant 0 : i32
    %c0_i32_0 = arith.constant 0 : i32
    return %arg0, %c0_i32 : i32, i32
  }
  func.func @transform_4(%arg0: i32) -> (i32, i32) {
    %c0_i32 = arith.constant 0 : i32
    %c0_i32_0 = arith.constant 0 : i32
    %c0_i32_1 = arith.constant 0 : i32
    return %c0_i32, %c0_i32_0 : i32, i32
  }
  func.func @transform_5(%arg0: i32) -> (i32, i32) {
    %c0_i32 = arith.constant 0 : i32
    %c0_i32_0 = arith.constant 0 : i32
    %c0_i32_1 = arith.constant 0 : i32
    return %c0_i32, %c0_i32_0 : i32, i32
  }
  func.func @transform_6(%arg0: i32) -> (i32, i32) {
    %c0_i32 = arith.constant 0 : i32
    %c0_i32_0 = arith.constant 0 : i32
    return %arg0, %c0_i32 : i32, i32
  }
  func.func @transform_7(%arg0: i32) -> (i32, i32) {
    %c0_i32 = arith.constant 0 : i32
    %c0_i32_0 = arith.constant 0 : i32
    %c0_i32_1 = arith.constant 0 : i32
    return %c0_i32, %c0_i32_0 : i32, i32
  }
  func.func @transform_8(%arg0: i32) -> (i32, i32) {
    %c0_i32 = arith.constant 0 : i32
    %c0_i32_0 = arith.constant 0 : i32
    %c0_i32_1 = arith.constant 0 : i32
    return %c0_i32, %c0_i32_0 : i32, i32
  }
  func.func @transform_9(%arg0: i32) -> (i32, i32) {
    %c0_i32 = arith.constant 0 : i32
    %c0_i32_0 = arith.constant 0 : i32
    return %arg0, %c0_i32 : i32, i32
  }
}

module attributes {stable_mosaic.version = 11 : i64} {
  func.func @kernel(%arg0: i32, %arg1: memref<2x128xf32, #tpu.memory_space<vmem>>, %arg2: memref<128x128xf32, #tpu.memory_space<vmem>>, %arg3: memref<1x128xf32, #tpu.memory_space<vmem>>, %arg4: memref<2x64xf32, #tpu.memory_space<vmem>>, %arg5: memref<64x128xf32, #tpu.memory_space<vmem>>, %arg6: memref<1x128xf32, #tpu.memory_space<vmem>>, %arg7: memref<2x24xf32, #tpu.memory_space<vmem>>, %arg8: memref<24x128xf32, #tpu.memory_space<vmem>>, %arg9: memref<1x128xf32, #tpu.memory_space<vmem>>, %arg10: memref<2x384xf32, #tpu.memory_space<vmem>>) attributes {dimension_semantics = [#tpu.dimension_semantics<parallel>], iteration_bounds = array<i64: 1>, scalar_prefetch = 0 : i64, scratch_operands = 0 : i64, tpu.core_type = #tpu.core_type<tc>, window_params = [{transform_indices = @transform_0, window_bounds = array<i64: 2, 128>}, {pipeline_mode = #tpu.pipeline_mode<synchronous>, transform_indices = @transform_1, window_bounds = array<i64: 128, 128>}, {pipeline_mode = #tpu.pipeline_mode<synchronous>, transform_indices = @transform_2, window_bounds = array<i64: 1, 128>}, {transform_indices = @transform_3, window_bounds = array<i64: 2, 64>}, {pipeline_mode = #tpu.pipeline_mode<synchronous>, transform_indices = @transform_4, window_bounds = array<i64: 64, 128>}, {pipeline_mode = #tpu.pipeline_mode<synchronous>, transform_indices = @transform_5, window_bounds = array<i64: 1, 128>}, {transform_indices = @transform_6, window_bounds = array<i64: 2, 24>}, {pipeline_mode = #tpu.pipeline_mode<synchronous>, transform_indices = @transform_7, window_bounds = array<i64: 24, 128>}, {pipeline_mode = #tpu.pipeline_mode<synchronous>, transform_indices = @transform_8, window_bounds = array<i64: 1, 128>}, {transform_indices = @transform_9, window_bounds = array<i64: 2, 384>}]} {
    %c0 = arith.constant 0 : index
    %c0_0 = arith.constant 0 : index
    %0 = vector.load %arg1[%c0, %c0_0] : memref<2x128xf32, #tpu.memory_space<vmem>>, vector<2x128xf32>
    %c0_1 = arith.constant 0 : index
    %c0_2 = arith.constant 0 : index
    %1 = vector.load %arg2[%c0_1, %c0_2] : memref<128x128xf32, #tpu.memory_space<vmem>>, vector<128x128xf32>
    %c0_3 = arith.constant 0 : index
    %c0_4 = arith.constant 0 : index
    %2 = vector.load %arg3[%c0_3, %c0_4] : memref<1x128xf32, #tpu.memory_space<vmem>>, vector<1x128xf32>
    %cst = arith.constant dense<0.000000e+00> : vector<2x128xf32>
    %3 = tpu.matmul %0, %1, %cst {dimension_numbers = #tpu.dot_dimension_numbers<[1], [0], [0], [1], [0, 0, 1, 1], [], []>} : vector<2x128xf32>, vector<128x128xf32>, vector<2x128xf32> -> vector<2x128xf32>
    %4 = vector.broadcast %2 : vector<1x128xf32> to vector<2x128xf32>
    %5 = arith.addf %3, %4 : vector<2x128xf32>
    %cst_5 = arith.constant 0.000000e+00 : f32
    %6 = vector.broadcast %cst_5 : f32 to vector<2x128xf32>
    %7 = arith.maximumf %5, %6 : vector<2x128xf32>
    %c0_6 = arith.constant 0 : index
    %c0_7 = arith.constant 0 : index
    %8 = vector.load %arg10[%c0_6, %c0_7] : memref<2x384xf32, #tpu.memory_space<vmem>>, vector<2x128xf32>
    tpu.vector_store %arg10[%c0_6, %c0_7], %7 {strides = array<i32>} : memref<2x384xf32, #tpu.memory_space<vmem>>, vector<2x128xf32>,
    %c0_8 = arith.constant 0 : index
    %c0_9 = arith.constant 0 : index
    %9 = vector.load %arg4[%c0_8, %c0_9] : memref<2x64xf32, #tpu.memory_space<vmem>>, vector<2x64xf32>
    %c0_10 = arith.constant 0 : index
    %c0_11 = arith.constant 0 : index
    %10 = vector.load %arg5[%c0_10, %c0_11] : memref<64x128xf32, #tpu.memory_space<vmem>>, vector<64x128xf32>
    %c0_12 = arith.constant 0 : index
    %c0_13 = arith.constant 0 : index
    %11 = vector.load %arg6[%c0_12, %c0_13] : memref<1x128xf32, #tpu.memory_space<vmem>>, vector<1x128xf32>
    %cst_14 = arith.constant dense<0.000000e+00> : vector<2x128xf32>
    %12 = tpu.matmul %9, %10, %cst_14 {dimension_numbers = #tpu.dot_dimension_numbers<[1], [0], [0], [1], [0, 0, 1, 1], [], []>} : vector<2x64xf32>, vector<64x128xf32>, vector<2x128xf32> -> vector<2x128xf32>
    %13 = vector.broadcast %11 : vector<1x128xf32> to vector<2x128xf32>
    %14 = arith.addf %12, %13 : vector<2x128xf32>
    %cst_15 = arith.constant 0.000000e+00 : f32
    %15 = vector.broadcast %cst_15 : f32 to vector<2x128xf32>
    %16 = arith.maximumf %14, %15 : vector<2x128xf32>
    %c0_16 = arith.constant 0 : index
    %c128 = arith.constant 128 : index
    %17 = vector.load %arg10[%c0_16, %c128] : memref<2x384xf32, #tpu.memory_space<vmem>>, vector<2x128xf32>
    tpu.vector_store %arg10[%c0_16, %c128], %16 {strides = array<i32>} : memref<2x384xf32, #tpu.memory_space<vmem>>, vector<2x128xf32>,
    %c0_17 = arith.constant 0 : index
    %c0_18 = arith.constant 0 : index
    %18 = vector.load %arg7[%c0_17, %c0_18] : memref<2x24xf32, #tpu.memory_space<vmem>>, vector<2x24xf32>
    %c0_19 = arith.constant 0 : index
    %c0_20 = arith.constant 0 : index
    %19 = vector.load %arg8[%c0_19, %c0_20] : memref<24x128xf32, #tpu.memory_space<vmem>>, vector<24x128xf32>
    %c0_21 = arith.constant 0 : index
    %c0_22 = arith.constant 0 : index
    %20 = vector.load %arg9[%c0_21, %c0_22] : memref<1x128xf32, #tpu.memory_space<vmem>>, vector<1x128xf32>
    %cst_23 = arith.constant dense<0.000000e+00> : vector<2x128xf32>
    %21 = tpu.matmul %18, %19, %cst_23 {dimension_numbers = #tpu.dot_dimension_numbers<[1], [0], [0], [1], [0, 0, 1, 1], [], []>} : vector<2x24xf32>, vector<24x128xf32>, vector<2x128xf32> -> vector<2x128xf32>
    %22 = vector.broadcast %20 : vector<1x128xf32> to vector<2x128xf32>
    %23 = arith.addf %21, %22 : vector<2x128xf32>
    %cst_24 = arith.constant 0.000000e+00 : f32
    %24 = vector.broadcast %cst_24 : f32 to vector<2x128xf32>
    %25 = arith.maximumf %23, %24 : vector<2x128xf32>
    %c0_25 = arith.constant 0 : index
    %c256 = arith.constant 256 : index
    %26 = vector.load %arg10[%c0_25, %c256] : memref<2x384xf32, #tpu.memory_space<vmem>>, vector<2x128xf32>
    tpu.vector_store %arg10[%c0_25, %c256], %25 {strides = array<i32>} : memref<2x384xf32, #tpu.memory_space<vmem>>, vector<2x128xf32>,
    return
  }
  func.func @transform_0(%arg0: i32) -> (i32, i32) {
    %c0_i32 = arith.constant 0 : i32
    %c0_i32_0 = arith.constant 0 : i32
    return %arg0, %c0_i32 : i32, i32
  }
  func.func @transform_1(%arg0: i32) -> (i32, i32) {
    %c0_i32 = arith.constant 0 : i32
    %c0_i32_0 = arith.constant 0 : i32
    %c0_i32_1 = arith.constant 0 : i32
    return %c0_i32, %c0_i32_0 : i32, i32
  }
  func.func @transform_2(%arg0: i32) -> (i32, i32) {
    %c0_i32 = arith.constant 0 : i32
    %c0_i32_0 = arith.constant 0 : i32
    %c0_i32_1 = arith.constant 0 : i32
    return %c0_i32, %c0_i32_0 : i32, i32
  }
  func.func @transform_3(%arg0: i32) -> (i32, i32) {
    %c0_i32 = arith.constant 0 : i32
    %c0_i32_0 = arith.constant 0 : i32
    return %arg0, %c0_i32 : i32, i32
  }
  func.func @transform_4(%arg0: i32) -> (i32, i32) {
    %c0_i32 = arith.constant 0 : i32
    %c0_i32_0 = arith.constant 0 : i32
    %c0_i32_1 = arith.constant 0 : i32
    return %c0_i32, %c0_i32_0 : i32, i32
  }
  func.func @transform_5(%arg0: i32) -> (i32, i32) {
    %c0_i32 = arith.constant 0 : i32
    %c0_i32_0 = arith.constant 0 : i32
    %c0_i32_1 = arith.constant 0 : i32
    return %c0_i32, %c0_i32_0 : i32, i32
  }
  func.func @transform_6(%arg0: i32) -> (i32, i32) {
    %c0_i32 = arith.constant 0 : i32
    %c0_i32_0 = arith.constant 0 : i32
    return %arg0, %c0_i32 : i32, i32
  }
  func.func @transform_7(%arg0: i32) -> (i32, i32) {
    %c0_i32 = arith.constant 0 : i32
    %c0_i32_0 = arith.constant 0 : i32
    %c0_i32_1 = arith.constant 0 : i32
    return %c0_i32, %c0_i32_0 : i32, i32
  }
  func.func @transform_8(%arg0: i32) -> (i32, i32) {
    %c0_i32 = arith.constant 0 : i32
    %c0_i32_0 = arith.constant 0 : i32
    %c0_i32_1 = arith.constant 0 : i32
    return %c0_i32, %c0_i32_0 : i32, i32
  }
  func.func @transform_9(%arg0: i32) -> (i32, i32) {
    %c0_i32 = arith.constant 0 : i32
    %c0_i32_0 = arith.constant 0 : i32
    return %arg0, %c0_i32 : i32, i32
  }
}

</mosaic_0001>

<llo_original>
// kernel: tpu_custom_call.1
$region0: #{tpu_custom_call.1}
  #allocation0 [shape = 'u32[]', space=smem, size = 0x4, offset = 0x4, fixed_abs, tag = 'smem constant byte address 0x4 - core index']
  #allocation1 [shape = 'u32[72,128]{1,0:T(1,128)}', space=vmem, size = 0x9000, scoped, tag = 'internal scratch']
  %s0 = inlined_call_operand.hbm [shape: f32[2,128], index: 0, kind: input, shape index: {}]
  %s1 = inlined_call_operand.hbm [shape: f32[128,128], index: 1, kind: input, shape index: {}]
  %s2 = inlined_call_operand.hbm [shape: f32[1,128], index: 2, kind: input, shape index: {}]
  %s3 = inlined_call_operand.vmem [shape: f32[2,64], index: 3, kind: input, shape index: {}]
  %s4 = inlined_call_operand.hbm [shape: f32[64,128], index: 4, kind: input, shape index: {}]
  %s5 = inlined_call_operand.hbm [shape: f32[1,128], index: 5, kind: input, shape index: {}]
  %s6 = inlined_call_operand.vmem [shape: f32[2,24], index: 6, kind: input, shape index: {}]
  %s7 = inlined_call_operand.hbm [shape: f32[24,128], index: 7, kind: input, shape index: {}]
  %s8 = inlined_call_operand.vmem [shape: f32[1,128], index: 8, kind: input, shape index: {}]
  %s9 = inlined_call_operand.hbm [shape: f32[2,384], index: 9, kind: output, shape index: {}]
  %s10 = sld [smem:[#allocation0]]
  $region70: #{tpu_custom_call.1} parent=0
    _
  %s12 = ssub.s32 1, %s10
  %s13 = scalar_select 0, %s12, %s10
  $region1: #{tpu_custom_call.1} parent=0
    #allocation2 [shape = 'u8[1024]{0}', space=vmem, size = 0x400, scoped, tag = 'input window, operand 0, single buffered']
    #allocation3 [shape = 's32[1]{0}', space=sflag, size = 0x4, scoped, tag = 'scoped memory for tpu_custom_call.1']
    #allocation4 [shape = 's32[1]{0}', space=sflag, size = 0x4, scoped, tag = 'scoped memory for tpu_custom_call.1']
    #allocation5 [shape = 'u8[65536]{0}', space=vmem, size = 0x10000, scoped, tag = 'input window, operand 1, single buffered']
    #allocation6 [shape = 's32[1]{0}', space=sflag, size = 0x4, scoped, tag = 'scoped memory for tpu_custom_call.1']
    #allocation7 [shape = 'u8[512]{0}', space=vmem, size = 0x400, scoped, tag = 'input window, operand 2, single buffered']
    #allocation8 [shape = 'u8[32768]{0}', space=vmem, size = 0x8000, scoped, tag = 'input window, operand 4, single buffered']
    #allocation9 [shape = 's32[1]{0}', space=sflag, size = 0x4, scoped, tag = 'scoped memory for tpu_custom_call.1']
    #allocation10 [shape = 'u8[512]{0}', space=vmem, size = 0x400, scoped, tag = 'input window, operand 5, single buffered']
    #allocation11 [shape = 'u8[12288]{0}', space=vmem, size = 0x3000, scoped, tag = 'input window, operand 7, single buffered']
    #allocation12 [shape = 's32[1]{0}', space=sflag, size = 0x4, scoped, tag = 'scoped memory for tpu_custom_call.1']
    #allocation13 [shape = 'u8[3072]{0}', space=vmem, size = 0xc00, scoped, tag = 'output window, operand 0, single buffered']
    %14 = vsyncpa [#allocation3], 0
    %15 = vsyncpa [#allocation6], 0
    %16 = vsyncpa [#allocation9], 0
    %17 = vsyncpa [#allocation12], 0
    %18 = vsyncpa [#allocation4], 0
    // Predicated region
    $region2: #{tpu_custom_call.1} parent=1 // pred_check
      _
    $region3: #{tpu_custom_call.1} parent=1 // pred_check_branch
      %20 = sbr.rel (0) target = $region5
    $region4: #{tpu_custom_call.1} parent=1 // pred_region
      %22 = vsyncadd [#allocation3], 0
      %s24 = sshll.u32 %s0, 4
      %s25 = int_to_ptr.hbm [resolvable:$true] %s24
      %s26 = sshll.u32 [#allocation2], 4
      %s27 = int_to_ptr.vmem [resolvable:$true] %s26
      %29 = dma.hbm_to_vmem [thread:$0]  %s25, 32, %s27, [#allocation3]
    $region5: #{tpu_custom_call.1} parent=1 // pred_fallthru
      _
    // Predicated region
    $region6: #{tpu_custom_call.1} parent=1 // pred_check
      _
    $region7: #{tpu_custom_call.1} parent=1 // pred_check_branch
      %31 = sbr.rel (0) target = $region9
    $region8: #{tpu_custom_call.1} parent=1 // pred_region
      %33 = vsyncadd [#allocation6], 0
      %s34 = sshll.u32 %s1, 4
      %s35 = int_to_ptr.hbm [resolvable:$true] %s34
      %s36 = sshll.u32 [#allocation5], 4
      %s37 = int_to_ptr.vmem [resolvable:$true] %s36
      %42 = dma.hbm_to_vmem [thread:$0]  %s35, 2048, %s37, [#allocation6], 128, 128, 8
    $region9: #{tpu_custom_call.1} parent=1 // pred_fallthru
      _
    // Predicated region
    $region10: #{tpu_custom_call.1} parent=1 // pred_check
      _
    $region11: #{tpu_custom_call.1} parent=1 // pred_check_branch
      %44 = sbr.rel (0) target = $region13
    $region12: #{tpu_custom_call.1} parent=1 // pred_region
      %46 = vsyncadd [#allocation6], 0
      %s48 = sshll.u32 %s2, 4
      %s49 = int_to_ptr.hbm [resolvable:$true] %s48
      %s50 = sshll.u32 [#allocation7], 4
      %s51 = int_to_ptr.vmem [resolvable:$true] %s50
      %53 = dma.hbm_to_vmem [thread:$0]  %s49, 16, %s51, [#allocation6]
    $region13: #{tpu_custom_call.1} parent=1 // pred_fallthru
      _
    // Predicated region
    $region14: #{tpu_custom_call.1} parent=1 // pred_check
      _
    $region15: #{tpu_custom_call.1} parent=1 // pred_check_branch
      %55 = sbr.rel (0) target = $region17
    $region16: #{tpu_custom_call.1} parent=1 // pred_region
      _
    $region17: #{tpu_custom_call.1} parent=1 // pred_fallthru
      _
    // Predicated region
    $region18: #{tpu_custom_call.1} parent=1 // pred_check
      _
    $region19: #{tpu_custom_call.1} parent=1 // pred_check_branch
      %57 = sbr.rel (0) target = $region21
    $region20: #{tpu_custom_call.1} parent=1 // pred_region
      %59 = vsyncadd [#allocation9], 0
      %s60 = sshll.u32 %s4, 4
      %s61 = int_to_ptr.hbm [resolvable:$true] %s60
      %s62 = sshll.u32 [#allocation8], 4
      %s63 = int_to_ptr.vmem [resolvable:$true] %s62
      %68 = dma.hbm_to_vmem [thread:$0]  %s61, 1024, %s63, [#allocation9], 128, 128, 8
    $region21: #{tpu_custom_call.1} parent=1 // pred_fallthru
      _
    // Predicated region
    $region22: #{tpu_custom_call.1} parent=1 // pred_check
      _
    $region23: #{tpu_custom_call.1} parent=1 // pred_check_branch
      %70 = sbr.rel (0) target = $region25
    $region24: #{tpu_custom_call.1} parent=1 // pred_region
      %72 = vsyncadd [#allocation9], 0
      %s74 = sshll.u32 %s5, 4
      %s75 = int_to_ptr.hbm [resolvable:$true] %s74
      %s76 = sshll.u32 [#allocation10], 4
      %s77 = int_to_ptr.vmem [resolvable:$true] %s76
      %79 = dma.hbm_to_vmem [thread:$0]  %s75, 16, %s77, [#allocation9]
    $region25: #{tpu_custom_call.1} parent=1 // pred_fallthru
      _
    // Predicated region
    $region26: #{tpu_custom_call.1} parent=1 // pred_check
      _
    $region27: #{tpu_custom_call.1} parent=1 // pred_check_branch
      %81 = sbr.rel (0) target = $region29
    $region28: #{tpu_custom_call.1} parent=1 // pred_region
      _
    $region29: #{tpu_custom_call.1} parent=1 // pred_fallthru
      _
    // Predicated region
    $region30: #{tpu_custom_call.1} parent=1 // pred_check
      _
    $region31: #{tpu_custom_call.1} parent=1 // pred_check_branch
      %83 = sbr.rel (0) target = $region33
    $region32: #{tpu_custom_call.1} parent=1 // pred_region
      %85 = vsyncadd [#allocation12], 0
      %s86 = sshll.u32 %s7, 4
      %s87 = int_to_ptr.hbm [resolvable:$true] %s86
      %s88 = sshll.u32 [#allocation11], 4
      %s89 = int_to_ptr.vmem [resolvable:$true] %s88
      %94 = dma.hbm_to_vmem [thread:$0]  %s87, 384, %s89, [#allocation12], 128, 128, 8
    $region33: #{tpu_custom_call.1} parent=1 // pred_fallthru
      _
    // Predicated region
    $region34: #{tpu_custom_call.1} parent=1 // pred_check
      _
    $region35: #{tpu_custom_call.1} parent=1 // pred_check_branch
      %96 = sbr.rel (0) target = $region37
    $region36: #{tpu_custom_call.1} parent=1 // pred_region
      _
    $region37: #{tpu_custom_call.1} parent=1 // pred_fallthru
      _
    // Predicated region
    $region38: #{tpu_custom_call.1} parent=1 // pred_check
      _
    $region39: #{tpu_custom_call.1} parent=1 // pred_check_branch
      %98 = sbr.rel (0) target = $region41
    $region40: #{tpu_custom_call.1} parent=1 // pred_region
      %100 = dma.done [#allocation3], 32
    $region41: #{tpu_custom_call.1} parent=1 // pred_fallthru
      _
    // Predicated region
    $region42: #{tpu_custom_call.1} parent=1 // pred_check
      _
    $region43: #{tpu_custom_call.1} parent=1 // pred_check_branch
      %102 = sbr.rel (0) target = $region45
    $region44: #{tpu_custom_call.1} parent=1 // pred_region
      %104 = dma.done [#allocation6], 2048
    $region45: #{tpu_custom_call.1} parent=1 // pred_fallthru
      _
    // Predicated region
    $region46: #{tpu_custom_call.1} parent=1 // pred_check
      _
    $region47: #{tpu_custom_call.1} parent=1 // pred_check_branch
      %106 = sbr.rel (0) target = $region49
    $region48: #{tpu_custom_call.1} parent=1 // pred_region
      %108 = dma.done [#allocation6], 16
    $region49: #{tpu_custom_call.1} parent=1 // pred_fallthru
      _
    // Predicated region
    $region50: #{tpu_custom_call.1} parent=1 // pred_check
      _
    $region51: #{tpu_custom_call.1} parent=1 // pred_check_branch
      %110 = sbr.rel (0) target = $region53
    $region52: #{tpu_custom_call.1} parent=1 // pred_region
      %112 = dma.done [#allocation9], 1024
    $region53: #{tpu_custom_call.1} parent=1 // pred_fallthru
      _
    // Predicated region
    $region54: #{tpu_custom_call.1} parent=1 // pred_check
      _
    $region55: #{tpu_custom_call.1} parent=1 // pred_check_branch
      %114 = sbr.rel (0) target = $region57
    $region56: #{tpu_custom_call.1} parent=1 // pred_region
      %116 = dma.done [#allocation9], 16
    $region57: #{tpu_custom_call.1} parent=1 // pred_fallthru
      _
    // Predicated region
    $region58: #{tpu_custom_call.1} parent=1 // pred_check
      _
    $region59: #{tpu_custom_call.1} parent=1 // pred_check_branch
      %118 = sbr.rel (0) target = $region61
    $region60: #{tpu_custom_call.1} parent=1 // pred_region
      %120 = dma.done [#allocation12], 384
    $region61: #{tpu_custom_call.1} parent=1 // pred_fallthru
      _
    %v121 = vld [vmem:[#allocation2] sm:$0x3]
    %v122 = vld [vmem:[#allocation5] sm:$0xff]
    %v123 = vld [vmem:[#allocation5 + $0x8] sm:$0xff]
    %v124 = vld [vmem:[#allocation5 + $0x10] sm:$0xff]
    %v125 = vld [vmem:[#allocation5 + $0x18] sm:$0xff]
    %v126 = vld [vmem:[#allocation5 + $0x20] sm:$0xff]
    %v127 = vld [vmem:[#allocation5 + $0x28] sm:$0xff]
    %v128 = vld [vmem:[#allocation5 + $0x30] sm:$0xff]
    %v129 = vld [vmem:[#allocation5 + $0x38] sm:$0xff]
    %v130 = vld [vmem:[#allocation5 + $0x40] sm:$0xff]
    %v131 = vld [vmem:[#allocation5 + $0x48] sm:$0xff]
    %v132 = vld [vmem:[#allocation5 + $0x50] sm:$0xff]
    %v133 = vld [vmem:[#allocation5 + $0x58] sm:$0xff]
    %v134 = vld [vmem:[#allocation5 + $0x60] sm:$0xff]
    %v135 = vld [vmem:[#allocation5 + $0x68] sm:$0xff]
    %v136 = vld [vmem:[#allocation5 + $0x70] sm:$0xff]
    %v137 = vld [vmem:[#allocation5 + $0x78] sm:$0xff]
    %v138 = vld [vmem:[#allocation7] sm:$0x1]
    %v140 = vperm.slane %v138, 0
    %142 = vmatpush.msra.mxu0 %v137
    %143 = vmatpush.msra.mxu0 %v136
    %144 = vmatpush.msra.mxu0 %v135
    %145 = vmatpush.msra.mxu0 %v134
    %146 = vmatpush.msra.mxu0 %v133
    %147 = vmatpush.msra.mxu0 %v132
    %148 = vmatpush.msra.mxu0 %v131
    %149 = vmatpush.msra.mxu0 %v130
    %150 = vmatpush.msra.mxu0 %v129
    %151 = vmatpush.msra.mxu0 %v128
    %152 = vmatpush.msra.mxu0 %v127
    %153 = vmatpush.msra.mxu0 %v126
    %154 = vmatpush.msra.mxu0 %v125
    %155 = vmatpush.msra.mxu0 %v124
    %156 = vmatpush.msra.mxu0 %v123
    %157 = vmatpush.msra.mxu0 %v122
    %158 = vmatmul.f32.gmra.mxu0 %v121
    %v159 = vpop.f32.mrf.mxu0
    %v160 = vadd.f32 %v140, %v159
    %161 = vdwg.mxu0
    %v162 = vmax.f32 %v160, 0.0
    %163 = vst [vmem:[#allocation13] sm:$0x3] %v162
    %v164 = vld [vmem:[%s3] sm:$0x3]
    %v165 = vld [vmem:[#allocation8] sm:$0xff]
    %v166 = vld [vmem:[#allocation8 + $0x8] sm:$0xff]
    %v167 = vld [vmem:[#allocation8 + $0x10] sm:$0xff]
    %v168 = vld [vmem:[#allocation8 + $0x18] sm:$0xff]
    %v169 = vld [vmem:[#allocation8 + $0x20] sm:$0xff]
    %v170 = vld [vmem:[#allocation8 + $0x28] sm:$0xff]
    %v171 = vld [vmem:[#allocation8 + $0x30] sm:$0xff]
    %v172 = vld [vmem:[#allocation8 + $0x38] sm:$0xff]
    %v173 = vld [vmem:[#allocation10] sm:$0x1]
    %v175 = vperm.slane %v173, 0
    %vm177 = vcmask 523264
    %v179 = vsel %vm177, %v164, 0
    %181 = vmatpush.msra.mxu0 0.0
    %182 = vmatpush.msra.mxu0 0.0
    %183 = vmatpush.msra.mxu0 0.0
    %184 = vmatpush.msra.mxu0 0.0
    %185 = vmatpush.msra.mxu0 0.0
    %186 = vmatpush.msra.mxu0 0.0
    %187 = vmatpush.msra.mxu0 0.0
    %188 = vmatpush.msra.mxu0 0.0
    %189 = vmatpush.msra.mxu0 %v172
    %190 = vmatpush.msra.mxu0 %v171
    %191 = vmatpush.msra.mxu0 %v170
    %192 = vmatpush.msra.mxu0 %v169
    %193 = vmatpush.msra.mxu0 %v168
    %194 = vmatpush.msra.mxu0 %v167
    %195 = vmatpush.msra.mxu0 %v166
    %196 = vmatpush.msra.mxu0 %v165
    %197 = vmatmul.f32.gmra.mxu0 %v179
    %v198 = vpop.f32.mrf.mxu0
    %v199 = vadd.f32 %v175, %v198
    %200 = vdwg.mxu0
    %v201 = vmax.f32 %v199, 0.0
    %202 = vst [vmem:[#allocation13 + $0x2] sm:$0x3] %v201
    %v203 = vld [vmem:[%s6] sm:$0x3]
    %v204 = vld [vmem:[#allocation11] sm:$0xff]
    %v205 = vld [vmem:[#allocation11 + $0x8] sm:$0xff]
    %v206 = vld [vmem:[#allocation11 + $0x10] sm:$0xff]
    %v207 = vld [vmem:[%s8] sm:$0x1]
    %v209 = vperm.slane %v207, 0
    %vm211 = vcmask 195584
    %v213 = vsel %vm211, %v203, 0
    %215 = vmatpush.msra.mxu0 0.0
    %216 = vmatpush.msra.mxu0 0.0
    %217 = vmatpush.msra.mxu0 0.0
    %218 = vmatpush.msra.mxu0 0.0
    %219 = vmatpush.msra.mxu0 0.0
    %220 = vmatpush.msra.mxu0 0.0
    %221 = vmatpush.msra.mxu0 0.0
    %222 = vmatpush.msra.mxu0 0.0
    %223 = vmatpush.msra.mxu0 0.0
    %224 = vmatpush.msra.mxu0 0.0
    %225 = vmatpush.msra.mxu0 0.0
    %226 = vmatpush.msra.mxu0 0.0
    %227 = vmatpush.msra.mxu0 0.0
    %228 = vmatpush.msra.mxu0 %v206
    %229 = vmatpush.msra.mxu0 %v205
    %230 = vmatpush.msra.mxu0 %v204
    %231 = vmatmul.f32.gmra.mxu0 %v213
    %v232 = vpop.f32.mrf.mxu0
    %v233 = vadd.f32 %v209, %v232
    %234 = vdwg.mxu0
    %v235 = vmax.f32 %v233, 0.0
    %236 = vst [vmem:[#allocation13 + $0x4] sm:$0x3] %v235
    // Predicated region
    $region62: #{tpu_custom_call.1} parent=1 // pred_check
      _
    $region63: #{tpu_custom_call.1} parent=1 // pred_check_branch
      %238 = sbr.rel (0) target = $region65
    $region64: #{tpu_custom_call.1} parent=1 // pred_region
      %240 = vsyncadd [#allocation4], 0
      %s242 = sshll.u32 [#allocation13], 4
      %s243 = int_to_ptr.vmem [resolvable:$true] %s242
      %s244 = sshll.u32 %s9, 4
      %s245 = int_to_ptr.hbm [resolvable:$true] %s244
      %247 = dma.vmem_to_hbm [thread:$0]  %s243, 96, %s245, [#allocation4]
    $region65: #{tpu_custom_call.1} parent=1 // pred_fallthru
      _
    // Predicated region
    $region66: #{tpu_custom_call.1} parent=1 // pred_check
      _
    $region67: #{tpu_custom_call.1} parent=1 // pred_check_branch
      %249 = sbr.rel (0) target = $region69
    $region68: #{tpu_custom_call.1} parent=1 // pred_region
      %251 = dma.done [#allocation4], 96
    $region69: #{tpu_custom_call.1} parent=1 // pred_fallthru
      _
    %252 = vsyncpa [#allocation3], 1
    %253 = vsyncpa [#allocation6], 1
    %254 = vsyncpa [#allocation9], 1
    %255 = vsyncpa [#allocation12], 1
    %256 = vsyncpa [#allocation4], 1

// kernel: tpu_custom_call.1
$region0: #{tpu_custom_call.1}
  #allocation0 [shape = 'u32[]', space=smem, size = 0x4, offset = 0x4, fixed_abs, tag = 'smem constant byte address 0x4 - core index']
  #allocation1 [shape = 'u32[72,128]{1,0:T(1,128)}', space=vmem, size = 0x9000, scoped, tag = 'internal scratch']
  %s0 = inlined_call_operand.hbm [shape: f32[2,128], index: 0, kind: input, shape index: {}]
  %s1 = inlined_call_operand.hbm [shape: f32[128,128], index: 1, kind: input, shape index: {}]
  %s2 = inlined_call_operand.hbm [shape: f32[1,128], index: 2, kind: input, shape index: {}]
  %s3 = inlined_call_operand.vmem [shape: f32[2,64], index: 3, kind: input, shape index: {}]
  %s4 = inlined_call_operand.hbm [shape: f32[64,128], index: 4, kind: input, shape index: {}]
  %s5 = inlined_call_operand.hbm [shape: f32[1,128], index: 5, kind: input, shape index: {}]
  %s6 = inlined_call_operand.vmem [shape: f32[2,24], index: 6, kind: input, shape index: {}]
  %s7 = inlined_call_operand.hbm [shape: f32[24,128], index: 7, kind: input, shape index: {}]
  %s8 = inlined_call_operand.vmem [shape: f32[1,128], index: 8, kind: input, shape index: {}]
  %s9 = inlined_call_operand.hbm [shape: f32[2,384], index: 9, kind: output, shape index: {}]
  %s10 = sld [smem:[#allocation0]]
  $region70: #{tpu_custom_call.1} parent=0
    _
  %s12 = ssub.s32 1, %s10
  %s13 = scalar_select 0, %s12, %s10
  $region1: #{tpu_custom_call.1} parent=0
    #allocation2 [shape = 'u8[1024]{0}', space=vmem, size = 0x400, scoped, tag = 'input window, operand 0, single buffered']
    #allocation3 [shape = 's32[1]{0}', space=sflag, size = 0x4, scoped, tag = 'scoped memory for tpu_custom_call.1']
    #allocation4 [shape = 's32[1]{0}', space=sflag, size = 0x4, scoped, tag = 'scoped memory for tpu_custom_call.1']
    #allocation5 [shape = 'u8[65536]{0}', space=vmem, size = 0x10000, scoped, tag = 'input window, operand 1, single buffered']
    #allocation6 [shape = 's32[1]{0}', space=sflag, size = 0x4, scoped, tag = 'scoped memory for tpu_custom_call.1']
    #allocation7 [shape = 'u8[512]{0}', space=vmem, size = 0x400, scoped, tag = 'input window, operand 2, single buffered']
    #allocation8 [shape = 'u8[32768]{0}', space=vmem, size = 0x8000, scoped, tag = 'input window, operand 4, single buffered']
    #allocation9 [shape = 's32[1]{0}', space=sflag, size = 0x4, scoped, tag = 'scoped memory for tpu_custom_call.1']
    #allocation10 [shape = 'u8[512]{0}', space=vmem, size = 0x400, scoped, tag = 'input window, operand 5, single buffered']
    #allocation11 [shape = 'u8[12288]{0}', space=vmem, size = 0x3000, scoped, tag = 'input window, operand 7, single buffered']
    #allocation12 [shape = 's32[1]{0}', space=sflag, size = 0x4, scoped, tag = 'scoped memory for tpu_custom_call.1']
    #allocation13 [shape = 'u8[3072]{0}', space=vmem, size = 0xc00, scoped, tag = 'output window, operand 0, single buffered']
    %14 = vsyncpa [#allocation3], 0
    %15 = vsyncpa [#allocation6], 0
    %16 = vsyncpa [#allocation9], 0
    %17 = vsyncpa [#allocation12], 0
    %18 = vsyncpa [#allocation4], 0
    // Predicated region
    $region2: #{tpu_custom_call.1} parent=1 // pred_check
      _
    $region3: #{tpu_custom_call.1} parent=1 // pred_check_branch
      %20 = sbr.rel (0) target = $region5
    $region4: #{tpu_custom_call.1} parent=1 // pred_region
      %22 = vsyncadd [#allocation3], 0
      %s24 = sshll.u32 %s0, 4
      %s25 = int_to_ptr.hbm [resolvable:$true] %s24
      %s26 = sshll.u32 [#allocation2], 4
      %s27 = int_to_ptr.vmem [resolvable:$true] %s26
      %29 = dma.hbm_to_vmem [thread:$0]  %s25, 32, %s27, [#allocation3]
    $region5: #{tpu_custom_call.1} parent=1 // pred_fallthru
      _
    // Predicated region
    $region6: #{tpu_custom_call.1} parent=1 // pred_check
      _
    $region7: #{tpu_custom_call.1} parent=1 // pred_check_branch
      %31 = sbr.rel (0) target = $region9
    $region8: #{tpu_custom_call.1} parent=1 // pred_region
      %33 = vsyncadd [#allocation6], 0
      %s34 = sshll.u32 %s1, 4
      %s35 = int_to_ptr.hbm [resolvable:$true] %s34
      %s36 = sshll.u32 [#allocation5], 4
      %s37 = int_to_ptr.vmem [resolvable:$true] %s36
      %42 = dma.hbm_to_vmem [thread:$0]  %s35, 2048, %s37, [#allocation6], 128, 128, 8
    $region9: #{tpu_custom_call.1} parent=1 // pred_fallthru
      _
    // Predicated region
    $region10: #{tpu_custom_call.1} parent=1 // pred_check
      _
    $region11: #{tpu_custom_call.1} parent=1 // pred_check_branch
      %44 = sbr.rel (0) target = $region13
    $region12: #{tpu_custom_call.1} parent=1 // pred_region
      %46 = vsyncadd [#allocation6], 0
      %s48 = sshll.u32 %s2, 4
      %s49 = int_to_ptr.hbm [resolvable:$true] %s48
      %s50 = sshll.u32 [#allocation7], 4
      %s51 = int_to_ptr.vmem [resolvable:$true] %s50
      %53 = dma.hbm_to_vmem [thread:$0]  %s49, 16, %s51, [#allocation6]
    $region13: #{tpu_custom_call.1} parent=1 // pred_fallthru
      _
    // Predicated region
    $region14: #{tpu_custom_call.1} parent=1 // pred_check
      _
    $region15: #{tpu_custom_call.1} parent=1 // pred_check_branch
      %55 = sbr.rel (0) target = $region17
    $region16: #{tpu_custom_call.1} parent=1 // pred_region
      _
    $region17: #{tpu_custom_call.1} parent=1 // pred_fallthru
      _
    // Predicated region
    $region18: #{tpu_custom_call.1} parent=1 // pred_check
      _
    $region19: #{tpu_custom_call.1} parent=1 // pred_check_branch
      %57 = sbr.rel (0) target = $region21
    $region20: #{tpu_custom_call.1} parent=1 // pred_region
      %59 = vsyncadd [#allocation9], 0
      %s60 = sshll.u32 %s4, 4
      %s61 = int_to_ptr.hbm [resolvable:$true] %s60
      %s62 = sshll.u32 [#allocation8], 4
      %s63 = int_to_ptr.vmem [resolvable:$true] %s62
      %68 = dma.hbm_to_vmem [thread:$0]  %s61, 1024, %s63, [#allocation9], 128, 128, 8
    $region21: #{tpu_custom_call.1} parent=1 // pred_fallthru
      _
    // Predicated region
    $region22: #{tpu_custom_call.1} parent=1 // pred_check
      _
    $region23: #{tpu_custom_call.1} parent=1 // pred_check_branch
      %70 = sbr.rel (0) target = $region25
    $region24: #{tpu_custom_call.1} parent=1 // pred_region
      %72 = vsyncadd [#allocation9], 0
      %s74 = sshll.u32 %s5, 4
      %s75 = int_to_ptr.hbm [resolvable:$true] %s74
      %s76 = sshll.u32 [#allocation10], 4
      %s77 = int_to_ptr.vmem [resolvable:$true] %s76
      %79 = dma.hbm_to_vmem [thread:$0]  %s75, 16, %s77, [#allocation9]
    $region25: #{tpu_custom_call.1} parent=1 // pred_fallthru
      _
    // Predicated region
    $region26: #{tpu_custom_call.1} parent=1 // pred_check
      _
    $region27: #{tpu_custom_call.1} parent=1 // pred_check_branch
      %81 = sbr.rel (0) target = $region29
    $region28: #{tpu_custom_call.1} parent=1 // pred_region
      _
    $region29: #{tpu_custom_call.1} parent=1 // pred_fallthru
      _
    // Predicated region
    $region30: #{tpu_custom_call.1} parent=1 // pred_check
      _
    $region31: #{tpu_custom_call.1} parent=1 // pred_check_branch
      %83 = sbr.rel (0) target = $region33
    $region32: #{tpu_custom_call.1} parent=1 // pred_region
      %85 = vsyncadd [#allocation12], 0
      %s86 = sshll.u32 %s7, 4
      %s87 = int_to_ptr.hbm [resolvable:$true] %s86
      %s88 = sshll.u32 [#allocation11], 4
      %s89 = int_to_ptr.vmem [resolvable:$true] %s88
      %94 = dma.hbm_to_vmem [thread:$0]  %s87, 384, %s89, [#allocation12], 128, 128, 8
    $region33: #{tpu_custom_call.1} parent=1 // pred_fallthru
      _
    // Predicated region
    $region34: #{tpu_custom_call.1} parent=1 // pred_check
      _
    $region35: #{tpu_custom_call.1} parent=1 // pred_check_branch
      %96 = sbr.rel (0) target = $region37
    $region36: #{tpu_custom_call.1} parent=1 // pred_region
      _
    $region37: #{tpu_custom_call.1} parent=1 // pred_fallthru
      _
    // Predicated region
    $region38: #{tpu_custom_call.1} parent=1 // pred_check
      _
    $region39: #{tpu_custom_call.1} parent=1 // pred_check_branch
      %98 = sbr.rel (0) target = $region41
    $region40: #{tpu_custom_call.1} parent=1 // pred_region
      %100 = dma.done [#allocation3], 32
    $region41: #{tpu_custom_call.1} parent=1 // pred_fallthru
      _
    // Predicated region
    $region42: #{tpu_custom_call.1} parent=1 // pred_check
      _
    $region43: #{tpu_custom_call.1} parent=1 // pred_check_branch
      %102 = sbr.rel (0) target = $region45
    $region44: #{tpu_custom_call.1} parent=1 // pred_region
      %104 = dma.done [#allocation6], 2048
    $region45: #{tpu_custom_call.1} parent=1 // pred_fallthru
      _
    // Predicated region
    $region46: #{tpu_custom_call.1} parent=1 // pred_check
      _
    $region47: #{tpu_custom_call.1} parent=1 // pred_check_branch
      %106 = sbr.rel (0) target = $region49
    $region48: #{tpu_custom_call.1} parent=1 // pred_region
      %108 = dma.done [#allocation6], 16
    $region49: #{tpu_custom_call.1} parent=1 // pred_fallthru
      _
    // Predicated region
    $region50: #{tpu_custom_call.1} parent=1 // pred_check
      _
    $region51: #{tpu_custom_call.1} parent=1 // pred_check_branch
      %110 = sbr.rel (0) target = $region53
    $region52: #{tpu_custom_call.1} parent=1 // pred_region
      %112 = dma.done [#allocation9], 1024
    $region53: #{tpu_custom_call.1} parent=1 // pred_fallthru
      _
    // Predicated region
    $region54: #{tpu_custom_call.1} parent=1 // pred_check
      _
    $region55: #{tpu_custom_call.1} parent=1 // pred_check_branch
      %114 = sbr.rel (0) target = $region57
    $region56: #{tpu_custom_call.1} parent=1 // pred_region
      %116 = dma.done [#allocation9], 16
    $region57: #{tpu_custom_call.1} parent=1 // pred_fallthru
      _
    // Predicated region
    $region58: #{tpu_custom_call.1} parent=1 // pred_check
      _
    $region59: #{tpu_custom_call.1} parent=1 // pred_check_branch
      %118 = sbr.rel (0) target = $region61
    $region60: #{tpu_custom_call.1} parent=1 // pred_region
      %120 = dma.done [#allocation12], 384
    $region61: #{tpu_custom_call.1} parent=1 // pred_fallthru
      _
    %v121 = vld [vmem:[#allocation2] sm:$0x3]
    %v122 = vld [vmem:[#allocation5] sm:$0xff]
    %v123 = vld [vmem:[#allocation5 + $0x8] sm:$0xff]
    %v124 = vld [vmem:[#allocation5 + $0x10] sm:$0xff]
    %v125 = vld [vmem:[#allocation5 + $0x18] sm:$0xff]
    %v126 = vld [vmem:[#allocation5 + $0x20] sm:$0xff]
    %v127 = vld [vmem:[#allocation5 + $0x28] sm:$0xff]
    %v128 = vld [vmem:[#allocation5 + $0x30] sm:$0xff]
    %v129 = vld [vmem:[#allocation5 + $0x38] sm:$0xff]
    %v130 = vld [vmem:[#allocation5 + $0x40] sm:$0xff]
    %v131 = vld [vmem:[#allocation5 + $0x48] sm:$0xff]
    %v132 = vld [vmem:[#allocation5 + $0x50] sm:$0xff]
    %v133 = vld [vmem:[#allocation5 + $0x58] sm:$0xff]
    %v134 = vld [vmem:[#allocation5 + $0x60] sm:$0xff]
    %v135 = vld [vmem:[#allocation5 + $0x68] sm:$0xff]
    %v136 = vld [vmem:[#allocation5 + $0x70] sm:$0xff]
    %v137 = vld [vmem:[#allocation5 + $0x78] sm:$0xff]
    %v138 = vld [vmem:[#allocation7] sm:$0x1]
    %v140 = vperm.slane %v138, 0
    %142 = vmatpush.msra.mxu0 %v137
    %143 = vmatpush.msra.mxu0 %v136
    %144 = vmatpush.msra.mxu0 %v135
    %145 = vmatpush.msra.mxu0 %v134
    %146 = vmatpush.msra.mxu0 %v133
    %147 = vmatpush.msra.mxu0 %v132
    %148 = vmatpush.msra.mxu0 %v131
    %149 = vmatpush.msra.mxu0 %v130
    %150 = vmatpush.msra.mxu0 %v129
    %151 = vmatpush.msra.mxu0 %v128
    %152 = vmatpush.msra.mxu0 %v127
    %153 = vmatpush.msra.mxu0 %v126
    %154 = vmatpush.msra.mxu0 %v125
    %155 = vmatpush.msra.mxu0 %v124
    %156 = vmatpush.msra.mxu0 %v123
    %157 = vmatpush.msra.mxu0 %v122
    %158 = vmatmul.f32.gmra.mxu0 %v121
    %v159 = vpop.f32.mrf.mxu0
    %v160 = vadd.f32 %v140, %v159
    %161 = vdwg.mxu0
    %v162 = vmax.f32 %v160, 0.0
    %163 = vst [vmem:[#allocation13] sm:$0x3] %v162
    %v164 = vld [vmem:[%s3] sm:$0x3]
    %v165 = vld [vmem:[#allocation8] sm:$0xff]
    %v166 = vld [vmem:[#allocation8 + $0x8] sm:$0xff]
    %v167 = vld [vmem:[#allocation8 + $0x10] sm:$0xff]
    %v168 = vld [vmem:[#allocation8 + $0x18] sm:$0xff]
    %v169 = vld [vmem:[#allocation8 + $0x20] sm:$0xff]
    %v170 = vld [vmem:[#allocation8 + $0x28] sm:$0xff]
    %v171 = vld [vmem:[#allocation8 + $0x30] sm:$0xff]
    %v172 = vld [vmem:[#allocation8 + $0x38] sm:$0xff]
    %v173 = vld [vmem:[#allocation10] sm:$0x1]
    %v175 = vperm.slane %v173, 0
    %vm177 = vcmask 523264
    %v179 = vsel %vm177, %v164, 0
    %181 = vmatpush.msra.mxu0 0.0
    %182 = vmatpush.msra.mxu0 0.0
    %183 = vmatpush.msra.mxu0 0.0
    %184 = vmatpush.msra.mxu0 0.0
    %185 = vmatpush.msra.mxu0 0.0
    %186 = vmatpush.msra.mxu0 0.0
    %187 = vmatpush.msra.mxu0 0.0
    %188 = vmatpush.msra.mxu0 0.0
    %189 = vmatpush.msra.mxu0 %v172
    %190 = vmatpush.msra.mxu0 %v171
    %191 = vmatpush.msra.mxu0 %v170
    %192 = vmatpush.msra.mxu0 %v169
    %193 = vmatpush.msra.mxu0 %v168
    %194 = vmatpush.msra.mxu0 %v167
    %195 = vmatpush.msra.mxu0 %v166
    %196 = vmatpush.msra.mxu0 %v165
    %197 = vmatmul.f32.gmra.mxu0 %v179
    %v198 = vpop.f32.mrf.mxu0
    %v199 = vadd.f32 %v175, %v198
    %200 = vdwg.mxu0
    %v201 = vmax.f32 %v199, 0.0
    %202 = vst [vmem:[#allocation13 + $0x2] sm:$0x3] %v201
    %v203 = vld [vmem:[%s6] sm:$0x3]
    %v204 = vld [vmem:[#allocation11] sm:$0xff]
    %v205 = vld [vmem:[#allocation11 + $0x8] sm:$0xff]
    %v206 = vld [vmem:[#allocation11 + $0x10] sm:$0xff]
    %v207 = vld [vmem:[%s8] sm:$0x1]
    %v209 = vperm.slane %v207, 0
    %vm211 = vcmask 195584
    %v213 = vsel %vm211, %v203, 0
    %215 = vmatpush.msra.mxu0 0.0
    %216 = vmatpush.msra.mxu0 0.0
    %217 = vmatpush.msra.mxu0 0.0
    %218 = vmatpush.msra.mxu0 0.0
    %219 = vmatpush.msra.mxu0 0.0
    %220 = vmatpush.msra.mxu0 0.0
    %221 = vmatpush.msra.mxu0 0.0
    %222 = vmatpush.msra.mxu0 0.0
    %223 = vmatpush.msra.mxu0 0.0
    %224 = vmatpush.msra.mxu0 0.0
    %225 = vmatpush.msra.mxu0 0.0
    %226 = vmatpush.msra.mxu0 0.0
    %227 = vmatpush.msra.mxu0 0.0
    %228 = vmatpush.msra.mxu0 %v206
    %229 = vmatpush.msra.mxu0 %v205
    %230 = vmatpush.msra.mxu0 %v204
    %231 = vmatmul.f32.gmra.mxu0 %v213
    %v232 = vpop.f32.mrf.mxu0
    %v233 = vadd.f32 %v209, %v232
    %234 = vdwg.mxu0
    %v235 = vmax.f32 %v233, 0.0
    %236 = vst [vmem:[#allocation13 + $0x4] sm:$0x3] %v235
    // Predicated region
    $region62: #{tpu_custom_call.1} parent=1 // pred_check
      _
    $region63: #{tpu_custom_call.1} parent=1 // pred_check_branch
      %238 = sbr.rel (0) target = $region65
    $region64: #{tpu_custom_call.1} parent=1 // pred_region
      %240 = vsyncadd [#allocation4], 0
      %s242 = sshll.u32 [#allocation13], 4
      %s243 = int_to_ptr.vmem [resolvable:$true] %s242
      %s244 = sshll.u32 %s9, 4
      %s245 = int_to_ptr.hbm [resolvable:$true] %s244
      %247 = dma.vmem_to_hbm [thread:$0]  %s243, 96, %s245, [#allocation4]
    $region65: #{tpu_custom_call.1} parent=1 // pred_fallthru
      _
    // Predicated region
    $region66: #{tpu_custom_call.1} parent=1 // pred_check
      _
    $region67: #{tpu_custom_call.1} parent=1 // pred_check_branch
      %249 = sbr.rel (0) target = $region69
    $region68: #{tpu_custom_call.1} parent=1 // pred_region
      %251 = dma.done [#allocation4], 96
    $region69: #{tpu_custom_call.1} parent=1 // pred_fallthru
      _
    %252 = vsyncpa [#allocation3], 1
    %253 = vsyncpa [#allocation6], 1
    %254 = vsyncpa [#allocation9], 1
    %255 = vsyncpa [#allocation12], 1
    %256 = vsyncpa [#allocation4], 1

</llo_original>
